<compile_context>
chip_gen: v7x
topology: tpu7x:2x2x1
jax: 0.10.0
libtpu: 0.0.40
codegen_flags: <defaults>
</compile_context>

<pallas_src>
import functools
import math

import jax
import jax.numpy as jnp
from jax import lax
from jax.experimental import pallas as pl
from jax.experimental.pallas import tpu as pltpu


# ----------------------------------------------------------------------------
# tile-size helpers
# ----------------------------------------------------------------------------
def _pick_tile(dim, preferred, align):
    """Largest multiple of `align` <= preferred that divides `dim`, else full."""
    if dim <= preferred:
        return dim
    t = (preferred // align) * align
    while t >= align:
        if dim % t == 0:
            return t
        t -= align
    return dim


def _pick_head_block(num_heads):
    """Divisor of num_heads to batch per grid step (amortize step overhead)."""
    return math.gcd(num_heads, 8)


# ----------------------------------------------------------------------------
# Pallas kernels
# ----------------------------------------------------------------------------
def _linear_kernel(x_ref, w_ref, b_ref, o_ref, acc_ref):
    # grid = (M//tm, N//tn, K//tk); K axis is the reduction ("arbitrary").
    @pl.when(pl.program_id(2) == 0)
    def _():
        acc_ref[...] = jnp.zeros_like(acc_ref)

    acc_ref[...] += jnp.dot(
        x_ref[...].astype(jnp.bfloat16),
        w_ref[...].astype(jnp.bfloat16),
        preferred_element_type=jnp.float32,
    )

    @pl.when(pl.program_id(2) == pl.num_programs(2) - 1)
    def _():
        o_ref[...] = (acc_ref[...] + b_ref[...]).astype(o_ref.dtype)


def linear_pallas(x, w, b):
    """x: [M, K], w: [K, N], b: [1, N] -> [M, N] (bf16 MXU, f32 accumulate)."""
    m, k = x.shape
    n = w.shape[1]
    tm = _pick_tile(m, 256, 8)
    tn = _pick_tile(n, 256, 128)
    tk = _pick_tile(k, 512, 128)
    grid = (m // tm, n // tn, k // tk)
    return pl.pallas_call(
        _linear_kernel,
        out_shape=jax.ShapeDtypeStruct((m, n), jnp.float32),
        grid=grid,
        in_specs=[
            pl.BlockSpec((tm, tk), lambda i, j, l: (i, l)),
            pl.BlockSpec((tk, tn), lambda i, j, l: (l, j)),
            pl.BlockSpec((1, tn), lambda i, j, l: (0, j)),
        ],
        out_specs=pl.BlockSpec((tm, tn), lambda i, j, l: (i, j)),
        scratch_shapes=[pltpu.VMEM((tm, tn), jnp.float32)],
        compiler_params=pltpu.CompilerParams(
            dimension_semantics=("parallel", "parallel", "arbitrary")
        ),
    )(x, w, b)


def _attn_weights_kernel(
    q_ref, k_ref, amask_ref, w_ref, *, inv_norm, start_budget, recent_budget, tq
):
    # q: [G, Tq, D], k: [G, S, D], amask: [1, 1, S] -> w: [G, Tq, S]
    q = q_ref[...].astype(jnp.bfloat16)
    k = k_ref[...].astype(jnp.bfloat16)
    # contraction on D for both operands (no explicit transpose of K)
    scores = (
        jnp.einsum("gqd,gkd->gqk", q, k, preferred_element_type=jnp.float32)
        * inv_norm
    )
    scores = scores + amask_ref[...]  # additive HF attention mask, [1,1,S]

    # causal + CAM (start/recent budget) mask, generated in-kernel:
    #   keep[i, j] = (j <= i) and (j < start_budget or j >= i - recent_budget)
    q0 = pl.program_id(1) * tq
    rows = q0 + lax.broadcasted_iota(jnp.int32, scores.shape, 1)
    cols = lax.broadcasted_iota(jnp.int32, scores.shape, 2)
    keep = (cols <= rows) & ((cols < start_budget) | (cols >= rows - recent_budget))
    scores = jnp.where(keep, scores, jnp.finfo(jnp.float32).min)

    # softmax over key dim (f32 statistics)
    m = jnp.max(scores, axis=-1, keepdims=True)
    e = jnp.exp(scores - m)
    denom = jnp.sum(e, axis=-1, keepdims=True)
    w_ref[...] = e * pl.reciprocal(denom, approx=True)


def attn_weights_pallas(query, key, amask, norm_factor, start_budget, recent_budget):
    B, H, S, D = query.shape
    qf = query.reshape(B * H, S, D)
    kf = key.reshape(B * H, S, D)
    g = _pick_head_block(H)          # heads per grid step (divides H)
    tq = _pick_tile(S, 128, 8)       # query tile (bounds VMEM at large S)

    kernel = functools.partial(
        _attn_weights_kernel,
        inv_norm=1.0 / norm_factor,
        start_budget=start_budget,
        recent_budget=recent_budget,
        tq=tq,
    )
    w = pl.pallas_call(
        kernel,
        out_shape=jax.ShapeDtypeStruct((B * H, S, S), jnp.float32),
        grid=(B * H // g, S // tq),
        in_specs=[
            pl.BlockSpec((g, tq, D), lambda i, qi: (i, qi, 0)),
            pl.BlockSpec((g, S, D), lambda i, qi: (i, 0, 0)),
            pl.BlockSpec((1, 1, S), lambda i, qi: ((i * g) // H, 0, 0)),
        ],
        out_specs=pl.BlockSpec((g, tq, S), lambda i, qi: (i, qi, 0)),
        compiler_params=pltpu.CompilerParams(
            dimension_semantics=("parallel", "arbitrary")
        ),
    )(qf, kf, amask)
    return w.reshape(B, H, S, S)


def _bmm_kernel(w_ref, v_ref, o_ref):
    # w: [G, Tq, S], v: [G, S, D] -> o: [G, Tq, D]
    o_ref[...] = jnp.einsum(
        "gqs,gsd->gqd",
        w_ref[...].astype(jnp.bfloat16),
        v_ref[...].astype(jnp.bfloat16),
        preferred_element_type=jnp.float32,
    )


def bmm_pallas(attn_weights, value):
    B, H, S, _ = attn_weights.shape
    D = value.shape[-1]
    wf = attn_weights.reshape(B * H, S, S)
    vf = value.reshape(B * H, S, D)
    g = _pick_head_block(H)
    tq = _pick_tile(S, 128, 8)
    out = pl.pallas_call(
        _bmm_kernel,
        out_shape=jax.ShapeDtypeStruct((B * H, S, D), jnp.float32),
        grid=(B * H // g, S // tq),
        in_specs=[
            pl.BlockSpec((g, tq, S), lambda i, qi: (i, qi, 0)),
            pl.BlockSpec((g, S, D), lambda i, qi: (i, 0, 0)),
        ],
        out_specs=pl.BlockSpec((g, tq, D), lambda i, qi: (i, qi, 0)),
        compiler_params=pltpu.CompilerParams(
            dimension_semantics=("parallel", "arbitrary")
        ),
    )(wf, vf)
    return out.reshape(B, H, S, D)


# ----------------------------------------------------------------------------
# Plain-JAX glue (rotary embedding, CAM value merging)
# ----------------------------------------------------------------------------
def rotary_cos_sin(rot_dim, seq_len, base):
    inv_freq = 1.0 / (
        base ** (jnp.arange(0, rot_dim, 2, dtype=jnp.float32) / rot_dim)
    )
    t = jnp.arange(seq_len, dtype=jnp.float32)
    freqs = jnp.einsum("i,j->ij", t, inv_freq)
    emb = jnp.concatenate([freqs, freqs], axis=-1)  # [S, rot]
    return jnp.cos(emb), jnp.sin(emb)


def rotate_half(x):
    d = x.shape[-1] // 2
    return jnp.concatenate([-x[..., d:], x[..., :d]], axis=-1)


def apply_rotary_pos_emb(q, k, cos, sin, position_ids):
    # q, k: [B, H, S, rot]; cos/sin: [S, rot]; position_ids: [B, S]
    cos_g = cos[position_ids][:, None, :, :]
    sin_g = sin[position_ids][:, None, :, :]
    q_emb = q * cos_g + rotate_half(q) * sin_g
    k_emb = k * cos_g + rotate_half(k) * sin_g
    return q_emb, k_emb


def local_cam_mask_jax(value, attn_weights, start_budget, recent_budget, rng_key):
    """Sequential stochastic CAM value merging (lax.fori_loop + prefix sums).

    attn_score(t) = mean_q<t attn_weights[:, :, q, :] is recovered from a
    cumulative sum over the query axis, so the per-step statistic is O(1)
    instead of re-reducing [:t, :t] every iteration.
    TODO(synk): torch.bernoulli replaced with uniform<p draws; RNG stream is
    not bit-exact with PyTorch (semantics otherwise identical).
    """
    B, H, S, D = value.shape
    merge_budget = recent_budget
    lo = start_budget + recent_budget
    if lo >= S or merge_budget <= 0:
        return value

    csum = jnp.cumsum(attn_weights, axis=-2)      # [B, H, S, S], sum over q<=row
    u = jax.random.uniform(rng_key, (S, H), dtype=jnp.float32)

    def body(t, val):
        # mean over query rows [0, t): csum[..., t-1, :] / t   -> [B, H, S]
        score_row = lax.dynamic_index_in_dim(csum, t - 1, axis=2, keepdims=False)
        attn_score0 = score_row[0] / t.astype(jnp.float32)     # [H, S]
        start_part = attn_score0[:, :start_budget]              # [H, sb]
        recent_part = lax.dynamic_slice(
            attn_score0, (0, t - recent_budget), (H, recent_budget)
        )                                                        # [H, rb]
        mean_attn = jnp.max(
            jnp.concatenate([start_part, recent_part], axis=-1), axis=-1
        )                                                        # [H]
        tgt = recent_part[:, 0]                                  # column t - rb
        # NaN-safe: mean_attn >= tgt >= 0, so tgt==0 whenever mean_attn==0.
        merge_prob = tgt / jnp.where(mean_attn > 0, mean_attn, 1.0)
        merge_prob = jnp.clip(merge_prob, 0.0, 1.0)
        merge_mask = (u[t] < merge_prob).astype(val.dtype)       # [H]

        src = lax.dynamic_slice(
            val, (0, 0, t - recent_budget, 0), (B, H, 1, D)
        )                                                        # [B, H, 1, D]
        score1 = src * merge_mask[None, :, None, None] / merge_budget
        window = lax.dynamic_slice(
            val, (0, 0, t - recent_budget + 1, 0), (B, H, merge_budget, D)
        )
        window = window + score1
        return lax.dynamic_update_slice(
            val, window, (0, 0, t - recent_budget + 1, 0)
        )

    return lax.fori_loop(lo, S, body, value)


# ----------------------------------------------------------------------------
# Full forward pass
# ----------------------------------------------------------------------------
def gptneox_attention_mask_forward(
    params, hidden_states, attention_mask, position_ids, cam_key, cfg
):
    B, S, hidden = hidden_states.shape
    H = cfg["num_attention_heads"]
    D = hidden // H
    rot = cfg["rotary_ndims"]

    # QKV projection (Pallas tiled matmul)
    qkv = linear_pallas(
        hidden_states.reshape(B * S, hidden), params["wqkv"], params["bqkv"]
    )
    qkv = qkv.reshape(B, S, H, 3 * D)
    query = jnp.transpose(qkv[..., :D], (0, 2, 1, 3))          # [B, H, S, D]
    key = jnp.transpose(qkv[..., D : 2 * D], (0, 2, 1, 3))
    value = jnp.transpose(qkv[..., 2 * D :], (0, 2, 1, 3))

    # Rotary embedding on first `rot` dims
    q_rot, q_pass = query[..., :rot], query[..., rot:]
    k_rot, k_pass = key[..., :rot], key[..., rot:]
    cos, sin = rotary_cos_sin(rot, S, cfg["rotary_emb_base"])
    q_rot, k_rot = apply_rotary_pos_emb(q_rot, k_rot, cos, sin, position_ids)
    query = jnp.concatenate([q_rot, q_pass], axis=-1)
    key = jnp.concatenate([k_rot, k_pass], axis=-1)

    # CAM budgets (static Python ints)
    start_budget = math.ceil(cfg["start_ratio"] * S)
    recent_budget = math.ceil(cfg["recent_ratio"] * S)

    amask = attention_mask.reshape(B, 1, S).astype(jnp.float32)  # additive mask
    norm_factor = math.sqrt(D)

    # scores + causal/CAM mask (generated in-kernel) + softmax (Pallas)
    attn_weights = attn_weights_pallas(
        query, key, amask, norm_factor, start_budget, recent_budget
    )

    # CAM value merging (sequential / stochastic; plain JAX fori_loop)
    value = local_cam_mask_jax(
        value, attn_weights, start_budget, recent_budget, cam_key
    )

    # attn_output = attn_weights @ value (Pallas)
    attn_output = bmm_pallas(attn_weights, value)              # [B, H, S, D]

    # merge heads + output projection (Pallas)
    attn_output = jnp.transpose(attn_output, (0, 2, 1, 3)).reshape(B, S, hidden)
    attn_output = linear_pallas(
        attn_output.reshape(B * S, hidden), params["wdense"], params["bdense"]
    ).reshape(B, S, hidden)

    present = None  # use_cache=False
    return attn_output, present, attn_weights


# ----------------------------------------------------------------------------
# Demo
# ----------------------------------------------------------------------------
if __name__ == "__main__":
    # Small GPT-NeoX-like config
    cfg = dict(
        num_attention_heads=4,
        hidden_size=64,
        rotary_pct=0.25,
        rotary_emb_base=10000.0,
        max_position_embeddings=128,
        start_ratio=0.125,
        recent_ratio=0.25,
    )
    cfg["rotary_ndims"] = int(
        (cfg["hidden_size"] // cfg["num_attention_heads"]) * cfg["rotary_pct"]
    )

    B, S, hidden = 2, 16, cfg["hidden_size"]

    root = jax.random.PRNGKey(0)
    k_x, k_wq, k_bq, k_wd, k_bd, k_cam = jax.random.split(root, 6)

    hidden_states = jax.random.normal(k_x, (B, S, hidden), jnp.float32)
    attention_mask = jnp.zeros((B, 1, 1, S), jnp.float32)  # additive HF mask
    position_ids = jnp.tile(jnp.arange(S, dtype=jnp.int32)[None, :], (B, 1))

    # Deterministic synthetic parameters (weights pre-transposed as [in, out]).
    params = {
        "wqkv": 0.02 * jax.random.normal(k_wq, (hidden, 3 * hidden), jnp.float32),
        "bqkv": 0.02 * jax.random.normal(k_bq, (1, 3 * hidden), jnp.float32),
        "wdense": 0.02 * jax.random.normal(k_wd, (hidden, hidden), jnp.float32),
        "bdense": 0.02 * jax.random.normal(k_bd, (1, hidden), jnp.float32),
    }

    attn_output, present, attn_weights = gptneox_attention_mask_forward(
        params, hidden_states, attention_mask, position_ids, k_cam, cfg
    )
    jax.block_until_ready(attn_output)
    jax.block_until_ready(attn_weights)

    assert attn_output.shape == (B, S, hidden)
    assert attn_weights.shape == (B, cfg["num_attention_heads"], S, S)
    assert bool(jnp.all(jnp.isfinite(attn_output)))
    print("KERNEL_OK")
</pallas_src>

<mosaic_0001>
module attributes {stable_mosaic.version = 11 : i64} {
  func.func @_linear_kernel(%arg0: i32, %arg1: i32, %arg2: i32, %arg3: memref<32x64xf32, #tpu.memory_space<vmem>>, %arg4: memref<64x192xf32, #tpu.memory_space<vmem>>, %arg5: memref<1x192xf32, #tpu.memory_space<vmem>>, %arg6: memref<32x192xf32, #tpu.memory_space<vmem>>, %arg7: memref<32x192xf32, #tpu.memory_space<vmem>>) attributes {dimension_semantics = [#tpu.dimension_semantics<parallel>, #tpu.dimension_semantics<parallel>, #tpu.dimension_semantics<arbitrary>], iteration_bounds = array<i64: 1, 1, 1>, scalar_prefetch = 0 : i64, scratch_operands = 1 : i64, tpu.core_type = #tpu.core_type<tc>, window_params = [{transform_indices = @transform_0, window_bounds = array<i64: 32, 64>}, {transform_indices = @transform_1, window_bounds = array<i64: 64, 192>}, {transform_indices = @transform_2, window_bounds = array<i64: 1, 192>}, {transform_indices = @transform_3, window_bounds = array<i64: 32, 192>}]} {
    %c0_i32 = arith.constant 0 : i32
    %0 = arith.cmpi eq, %arg2, %c0_i32 : i32
    %1 = arith.extui %0 : i1 to i32
    %c0_i32_0 = arith.constant 0 : i32
    %2 = arith.cmpi ne, %1, %c0_i32_0 : i32
    scf.if %2 {
      %cst_10 = arith.constant 0.000000e+00 : f32
      %14 = vector.broadcast %cst_10 : f32 to vector<32x192xf32>
      %c0_11 = arith.constant 0 : index
      %c0_12 = arith.constant 0 : index
      %15 = vector.load %arg7[%c0_11, %c0_12] : memref<32x192xf32, #tpu.memory_space<vmem>>, vector<32x192xf32>
      tpu.vector_store %arg7[%c0_11, %c0_12], %14 {strides = array<i32>} : memref<32x192xf32, #tpu.memory_space<vmem>>, vector<32x192xf32>,
    } else {
    }
    %c0 = arith.constant 0 : index
    %c0_1 = arith.constant 0 : index
    %3 = vector.load %arg7[%c0, %c0_1] : memref<32x192xf32, #tpu.memory_space<vmem>>, vector<32x192xf32>
    %c0_2 = arith.constant 0 : index
    %c0_3 = arith.constant 0 : index
    %4 = vector.load %arg3[%c0_2, %c0_3] : memref<32x64xf32, #tpu.memory_space<vmem>>, vector<32x64xf32>
    %5 = arith.truncf %4 : vector<32x64xf32> to vector<32x64xbf16>
    %c0_4 = arith.constant 0 : index
    %c0_5 = arith.constant 0 : index
    %6 = vector.load %arg4[%c0_4, %c0_5] : memref<64x192xf32, #tpu.memory_space<vmem>>, vector<64x192xf32>
    %7 = arith.truncf %6 : vector<64x192xf32> to vector<64x192xbf16>
    %cst = arith.constant dense<0.000000e+00> : vector<32x192xf32>
    %8 = tpu.matmul %5, %7, %cst {dimension_numbers = #tpu.dot_dimension_numbers<[1], [0], [0], [1], [0, 0, 1, 1], [], []>} : vector<32x64xbf16>, vector<64x192xbf16>, vector<32x192xf32> -> vector<32x192xf32>
    %9 = arith.addf %3, %8 : vector<32x192xf32>
    %c0_6 = arith.constant 0 : index
    %c0_7 = arith.constant 0 : index
    %10 = vector.load %arg7[%c0_6, %c0_7] : memref<32x192xf32, #tpu.memory_space<vmem>>, vector<32x192xf32>
    tpu.vector_store %arg7[%c0_6, %c0_7], %9 {strides = array<i32>} : memref<32x192xf32, #tpu.memory_space<vmem>>, vector<32x192xf32>,
    %c0_i32_8 = arith.constant 0 : i32
    %11 = arith.cmpi eq, %arg2, %c0_i32_8 : i32
    %12 = arith.extui %11 : i1 to i32
    %c0_i32_9 = arith.constant 0 : i32
    %13 = arith.cmpi ne, %12, %c0_i32_9 : i32
    scf.if %13 {
      %c0_10 = arith.constant 0 : index
      %c0_11 = arith.constant 0 : index
      %14 = vector.load %arg7[%c0_10, %c0_11] : memref<32x192xf32, #tpu.memory_space<vmem>>, vector<32x192xf32>
      %c0_12 = arith.constant 0 : index
      %c0_13 = arith.constant 0 : index
      %15 = vector.load %arg5[%c0_12, %c0_13] : memref<1x192xf32, #tpu.memory_space<vmem>>, vector<1x192xf32>
      %16 = vector.broadcast %15 : vector<1x192xf32> to vector<32x192xf32>
      %17 = arith.addf %14, %16 : vector<32x192xf32>
      %c0_14 = arith.constant 0 : index
      %c0_15 = arith.constant 0 : index
      %18 = vector.load %arg6[%c0_14, %c0_15] : memref<32x192xf32, #tpu.memory_space<vmem>>, vector<32x192xf32>
      tpu.vector_store %arg6[%c0_14, %c0_15], %17 {strides = array<i32>} : memref<32x192xf32, #tpu.memory_space<vmem>>, vector<32x192xf32>,
    } else {
    }
    return
  }
  func.func @transform_0(%arg0: i32, %arg1: i32, %arg2: i32) -> (i32, i32) {
    %c0_i32 = arith.constant 0 : i32
    return %arg0, %arg2 : i32, i32
  }
  func.func @transform_1(%arg0: i32, %arg1: i32, %arg2: i32) -> (i32, i32) {
    %c0_i32 = arith.constant 0 : i32
    return %arg2, %arg1 : i32, i32
  }
  func.func @transform_2(%arg0: i32, %arg1: i32, %arg2: i32) -> (i32, i32) {
    %c0_i32 = arith.constant 0 : i32
    %c0_i32_0 = arith.constant 0 : i32
    return %c0_i32, %arg1 : i32, i32
  }
  func.func @transform_3(%arg0: i32, %arg1: i32, %arg2: i32) -> (i32, i32) {
    %c0_i32 = arith.constant 0 : i32
    return %arg0, %arg1 : i32, i32
  }
}

</mosaic_0001>

<llo_original>
// kernel: tpu_custom_call.1
$region0: #{tpu_custom_call.1}
  #allocation0 [shape = 'u32[]', space=smem, size = 0x4, offset = 0x4, fixed_abs, tag = 'smem constant byte address 0x4 - core index']
  #allocation1 [shape = 'u32[144,128]{1,0:T(1,128)}', space=vmem, size = 0x12000, scoped, tag = 'internal scratch']
  #allocation2 [shape = 'f32[32,192]{1,0:T(8,128)}', space=vmem, size = 0x8000, scoped, tag = 'scratch operand']
  %s0 = inlined_call_operand.hbm [shape: f32[32,64], index: 0, kind: input, shape index: {}]
  %s1 = inlined_call_operand.hbm [shape: f32[64,192], index: 1, kind: input, shape index: {}]
  %s2 = inlined_call_operand.vmem [shape: f32[1,192], index: 2, kind: input, shape index: {}]
  %s3 = inlined_call_operand.hbm [shape: f32[32,192], index: 3, kind: output, shape index: {}]
  %s4 = sld [smem:[#allocation0]]
  $region38: #{tpu_custom_call.1} parent=0
    _
  %s6 = ssub.s32 1, %s4
  %s7 = scalar_select 0, %s6, %s4
  $region1: #{tpu_custom_call.1} parent=0
    #allocation3 [shape = 'u8[16384]{0}', space=vmem, size = 0x4000, scoped, tag = 'input window, operand 0, single buffered']
    #allocation4 [shape = 's32[1]{0}', space=sflag, size = 0x4, scoped, tag = 'scoped memory for tpu_custom_call.1']
    #allocation5 [shape = 's32[1]{0}', space=sflag, size = 0x4, scoped, tag = 'scoped memory for tpu_custom_call.1']
    #allocation6 [shape = 'u8[65536]{0}', space=vmem, size = 0x10000, scoped, tag = 'input window, operand 1, single buffered']
    #allocation7 [shape = 's32[1]{0}', space=sflag, size = 0x4, scoped, tag = 'scoped memory for tpu_custom_call.1']
    #allocation8 [shape = 'u8[32768]{0}', space=vmem, size = 0x8000, scoped, tag = 'output window, operand 0, single buffered']
    %8 = vsyncpa [#allocation4], 0
    %9 = vsyncpa [#allocation7], 0
    %10 = vsyncpa [#allocation5], 0
    // Predicated region
    $region2: #{tpu_custom_call.1} parent=1 // pred_check
      _
    $region3: #{tpu_custom_call.1} parent=1 // pred_check_branch
      %12 = sbr.rel (0) target = $region5
    $region4: #{tpu_custom_call.1} parent=1 // pred_region
      %s14 = ssub.s32 512, 512
      %15 = vsyncadd [#allocation4], %s14
      %s16 = sshll.u32 [#allocation3], 4
      %s17 = int_to_ptr.vmem [resolvable:$true] %s16
      %22 = dma.hbm_to_vmem [thread:$0]  %s0, 512, %s17, [#allocation4], 128, 128, 8
    $region5: #{tpu_custom_call.1} parent=1 // pred_fallthru
      _
    // Predicated region
    $region6: #{tpu_custom_call.1} parent=1 // pred_check
      _
    $region7: #{tpu_custom_call.1} parent=1 // pred_check_branch
      %24 = sbr.rel (0) target = $region9
    $region8: #{tpu_custom_call.1} parent=1 // pred_region
      %s26 = ssub.s32 2048, 2048
      %27 = vsyncadd [#allocation7], %s26
      %s28 = sshll.u32 [#allocation6], 4
      %s29 = int_to_ptr.vmem [resolvable:$true] %s28
      %34 = dma.hbm_to_vmem [thread:$0]  %s1, 2048, %s29, [#allocation7], 256, 256, 16
    $region9: #{tpu_custom_call.1} parent=1 // pred_fallthru
      _
    // Predicated region
    $region10: #{tpu_custom_call.1} parent=1 // pred_check
      _
    $region11: #{tpu_custom_call.1} parent=1 // pred_check_branch
      %36 = sbr.rel (0) target = $region13
    $region12: #{tpu_custom_call.1} parent=1 // pred_region
      _
    $region13: #{tpu_custom_call.1} parent=1 // pred_fallthru
      _
    // Predicated region
    $region14: #{tpu_custom_call.1} parent=1 // pred_check
      _
    $region15: #{tpu_custom_call.1} parent=1 // pred_check_branch
      %38 = sbr.rel (0) target = $region17
    $region16: #{tpu_custom_call.1} parent=1 // pred_region
      %39 = dma.done [#allocation4], 512
    $region17: #{tpu_custom_call.1} parent=1 // pred_fallthru
      _
    // Predicated region
    $region18: #{tpu_custom_call.1} parent=1 // pred_check
      _
    $region19: #{tpu_custom_call.1} parent=1 // pred_check_branch
      %41 = sbr.rel (0) target = $region21
    $region20: #{tpu_custom_call.1} parent=1 // pred_region
      %42 = dma.done [#allocation7], 2048
    $region21: #{tpu_custom_call.1} parent=1 // pred_fallthru
      _
    %p44 = scmp.eq.s32.totalorder 0, 0
    // Predicated region
    $region22: #{tpu_custom_call.1} parent=1 // pred_check
      %p45 = pneg %p44
    $region23: #{tpu_custom_call.1} parent=1 // pred_check_branch
      %47 = sbr.rel (%p45) target = $region25
    $region24: #{tpu_custom_call.1} parent=1 // pred_region
      %48 = vst [vmem:[#allocation2] sm:$0xff] 0.0
      %vm49 = vcmask 523264
      %50 = vst.msk [vmem:[#allocation2 + $0x8] sm:$0xff] %vm49, 0.0
      %51 = vst [vmem:[#allocation2 + $0x10] sm:$0xff] 0.0
      %52 = vst.msk [vmem:[#allocation2 + $0x18] sm:$0xff] %vm49, 0.0
      %53 = vst [vmem:[#allocation2 + $0x20] sm:$0xff] 0.0
      %54 = vst.msk [vmem:[#allocation2 + $0x28] sm:$0xff] %vm49, 0.0
      %55 = vst [vmem:[#allocation2 + $0x30] sm:$0xff] 0.0
      %56 = vst.msk [vmem:[#allocation2 + $0x38] sm:$0xff] %vm49, 0.0
    $region25: #{tpu_custom_call.1} parent=1 // pred_fallthru
      _
    %v57 = vld [vmem:[#allocation2] sm:$0xff]
    %v58 = vld [vmem:[#allocation2 + $0x8] sm:$0xff]
    %v59 = vld [vmem:[#allocation2 + $0x10] sm:$0xff]
    %v60 = vld [vmem:[#allocation2 + $0x18] sm:$0xff]
    %v61 = vld [vmem:[#allocation2 + $0x20] sm:$0xff]
    %v62 = vld [vmem:[#allocation2 + $0x28] sm:$0xff]
    %v63 = vld [vmem:[#allocation2 + $0x30] sm:$0xff]
    %v64 = vld [vmem:[#allocation2 + $0x38] sm:$0xff]
    %v65 = vld [vmem:[#allocation3] sm:$0xff]
    %v66 = vld [vmem:[#allocation3 + $0x8] sm:$0xff]
    %v67 = vld [vmem:[#allocation3 + $0x10] sm:$0xff]
    %v68 = vld [vmem:[#allocation3 + $0x18] sm:$0xff]
    %v69 = vpack.c.bf16 %v66, %v65
    %v70 = vpack.c.bf16 %v68, %v67
    %v71 = vld [vmem:[#allocation6] sm:$0xff]
    %v72 = vld [vmem:[#allocation6 + $0x8] sm:$0xff]
    %v73 = vld [vmem:[#allocation6 + $0x10] sm:$0xff]
    %v74 = vld [vmem:[#allocation6 + $0x18] sm:$0xff]
    %v75 = vld [vmem:[#allocation6 + $0x20] sm:$0xff]
    %v76 = vld [vmem:[#allocation6 + $0x28] sm:$0xff]
    %v77 = vld [vmem:[#allocation6 + $0x30] sm:$0xff]
    %v78 = vld [vmem:[#allocation6 + $0x38] sm:$0xff]
    %v79 = vld [vmem:[#allocation6 + $0x40] sm:$0xff]
    %v80 = vld [vmem:[#allocation6 + $0x48] sm:$0xff]
    %v81 = vld [vmem:[#allocation6 + $0x50] sm:$0xff]
    %v82 = vld [vmem:[#allocation6 + $0x58] sm:$0xff]
    %v83 = vld [vmem:[#allocation6 + $0x60] sm:$0xff]
    %v84 = vld [vmem:[#allocation6 + $0x68] sm:$0xff]
    %v85 = vld [vmem:[#allocation6 + $0x70] sm:$0xff]
    %v86 = vld [vmem:[#allocation6 + $0x78] sm:$0xff]
    %v87 = vpack.c.bf16 %v73, %v71
    %v88 = vpack.c.bf16 %v74, %v72
    %v89 = vpack.c.bf16 %v77, %v75
    %v90 = vpack.c.bf16 %v78, %v76
    %v91 = vpack.c.bf16 %v81, %v79
    %v92 = vpack.c.bf16 %v82, %v80
    %v93 = vpack.c.bf16 %v85, %v83
    %v94 = vpack.c.bf16 %v86, %v84
    %vm95 = vcmask 523264
    %v97 = vsel %vm95, %v69, 0
    %v100 = vsel %vm95, %v70, 0
    %102 = vmatprep.subr.bf16.mxu0 %v88
    %103 = vmatpush1.bf16.msra.mxu0 %v87
    %104 = vmatprep.subr.bf16.mxu0 %v90
    %105 = vmatpush1.bf16.msra.mxu0 %v89
    %106 = vmatprep.subr.bf16.mxu0 %v92
    %107 = vmatpush1.bf16.msra.mxu0 %v91
    %108 = vmatprep.subr.bf16.mxu0 %v94
    %109 = vmatpush1.bf16.msra.mxu0 %v93
    %110 = vmatprep.subr.bf16.mxu0 0
    %111 = vmatpush1.bf16.msra.mxu0 0
    %112 = vmatprep.subr.bf16.mxu0 0
    %113 = vmatpush1.bf16.msra.mxu0 0
    %114 = vmatprep.subr.bf16.mxu0 0
    %115 = vmatpush1.bf16.msra.mxu0 0
    %116 = vmatprep.subr.bf16.mxu0 0
    %117 = vmatpush1.bf16.msra.mxu0 0
    %118 = vmatprep.subr.bf16.mxu0 0
    %119 = vmatpush1.bf16.msra.mxu0 0
    %120 = vmatprep.subr.bf16.mxu0 0
    %121 = vmatpush1.bf16.msra.mxu0 0
    %122 = vmatprep.subr.bf16.mxu0 0
    %123 = vmatpush1.bf16.msra.mxu0 0
    %124 = vmatprep.subr.bf16.mxu0 0
    %125 = vmatpush1.bf16.msra.mxu0 0
    %126 = vmatprep.subr.bf16.mxu0 0
    %127 = vmatpush1.bf16.msra.mxu0 0
    %128 = vmatprep.subr.bf16.mxu0 0
    %129 = vmatpush1.bf16.msra.mxu0 0
    %130 = vmatprep.subr.bf16.mxu0 0
    %131 = vmatpush1.bf16.msra.mxu0 0
    %132 = vmatprep.subr.bf16.mxu0 0
    %133 = vmatpush1.bf16.msra.mxu0 0
    %134 = vmatprep.mubr.bf16.mxu0 0
    %135 = vmatmul.mubr.bf16.gmra.mrb[0].mxu0 %v97
    %v136 = vpop.f32.mrb[0].mxu0
    %v137 = vadd.f32 0.0, %v136
    %v138 = vpop.f32.mrb[0].mxu0
    %v139 = vadd.f32 0.0, %v138
    %v140 = vpop.f32.mrb[0].mxu0
    %v141 = vadd.f32 0.0, %v140
    %v142 = vpop.f32.mrb[0].mxu0
    %v143 = vadd.f32 0.0, %v142
    %144 = vmatprep.mubr.bf16.mxu0 0
    %145 = vmatmul.mubr.bf16.gmra.mrb[0].mxu0 %v100
    %v146 = vpop.f32.mrb[0].mxu0
    %v147 = vadd.f32 0.0, %v146
    %v148 = vpop.f32.mrb[0].mxu0
    %v149 = vadd.f32 0.0, %v148
    %v150 = vpop.f32.mrb[0].mxu0
    %v151 = vadd.f32 0.0, %v150
    %v152 = vpop.f32.mrb[0].mxu0
    %v153 = vadd.f32 0.0, %v152
    %154 = vdwg.mxu0
    %v155 = vadd.f32 %v57, %v137
    %v156 = vadd.f32 %v58, %v139
    %v157 = vadd.f32 %v59, %v141
    %v158 = vadd.f32 %v60, %v143
    %v159 = vadd.f32 %v61, %v147
    %v160 = vadd.f32 %v62, %v149
    %v161 = vadd.f32 %v63, %v151
    %v162 = vadd.f32 %v64, %v153
    %163 = vst [vmem:[#allocation2] sm:$0xff] %v155
    %164 = vst.msk [vmem:[#allocation2 + $0x8] sm:$0xff] %vm95, %v156
    %165 = vst [vmem:[#allocation2 + $0x10] sm:$0xff] %v157
    %166 = vst.msk [vmem:[#allocation2 + $0x18] sm:$0xff] %vm95, %v158
    %167 = vst [vmem:[#allocation2 + $0x20] sm:$0xff] %v159
    %168 = vst.msk [vmem:[#allocation2 + $0x28] sm:$0xff] %vm95, %v160
    %169 = vst [vmem:[#allocation2 + $0x30] sm:$0xff] %v161
    %170 = vst.msk [vmem:[#allocation2 + $0x38] sm:$0xff] %vm95, %v162
    // Predicated region
    $region26: #{tpu_custom_call.1} parent=1 // pred_check
      %p171 = pneg %p44
    $region27: #{tpu_custom_call.1} parent=1 // pred_check_branch
      %173 = sbr.rel (%p171) target = $region29
    $region28: #{tpu_custom_call.1} parent=1 // pred_region
      %v174 = vld [vmem:[#allocation2] sm:$0xff]
      %v175 = vld [vmem:[#allocation2 + $0x8] sm:$0xff]
      %v176 = vld [vmem:[#allocation2 + $0x10] sm:$0xff]
      %v177 = vld [vmem:[#allocation2 + $0x18] sm:$0xff]
      %v178 = vld [vmem:[#allocation2 + $0x20] sm:$0xff]
      %v179 = vld [vmem:[#allocation2 + $0x28] sm:$0xff]
      %v180 = vld [vmem:[#allocation2 + $0x30] sm:$0xff]
      %v181 = vld [vmem:[#allocation2 + $0x38] sm:$0xff]
      %v182 = vld [vmem:[%s2] sm:$0x3]
      %v184 = vlaneseq
      %v185 = vshrl.u32 %v184, 7
      %v186 = vsub.s32 0, %v185
      %v187 = vrot.slane %v182, %v186
      %v188 = vlaneseq
      %v189 = vshrl.u32 %v188, 7
      %v190 = vsub.s32 1, %v189
      %v191 = vrot.slane %v182, %v190
      %v194 = vadd.f32 %v174, %v187
      %v195 = vadd.f32 %v175, %v191
      %v196 = vadd.f32 %v176, %v187
      %v197 = vadd.f32 %v177, %v191
      %v198 = vadd.f32 %v178, %v187
      %v199 = vadd.f32 %v179, %v191
      %v200 = vadd.f32 %v180, %v187
      %v201 = vadd.f32 %v181, %v191
      %202 = vst [vmem:[#allocation8] sm:$0xff] %v194
      %203 = vst.msk [vmem:[#allocation8 + $0x8] sm:$0xff] %vm95, %v195
      %204 = vst [vmem:[#allocation8 + $0x10] sm:$0xff] %v196
      %205 = vst.msk [vmem:[#allocation8 + $0x18] sm:$0xff] %vm95, %v197
      %206 = vst [vmem:[#allocation8 + $0x20] sm:$0xff] %v198
      %207 = vst.msk [vmem:[#allocation8 + $0x28] sm:$0xff] %vm95, %v199
      %208 = vst [vmem:[#allocation8 + $0x30] sm:$0xff] %v200
      %209 = vst.msk [vmem:[#allocation8 + $0x38] sm:$0xff] %vm95, %v201
    $region29: #{tpu_custom_call.1} parent=1 // pred_fallthru
      _
    // Predicated region
    $region30: #{tpu_custom_call.1} parent=1 // pred_check
      _
    $region31: #{tpu_custom_call.1} parent=1 // pred_check_branch
      %211 = sbr.rel (0) target = $region33
    $region32: #{tpu_custom_call.1} parent=1 // pred_region
      %s213 = ssub.s32 1024, 1024
      %214 = vsyncadd [#allocation5], %s213
      %s215 = sshll.u32 [#allocation8], 4
      %s216 = int_to_ptr.vmem [resolvable:$true] %s215
      %221 = dma.vmem_to_hbm [thread:$0]  %s216, 1024, %s3, [#allocation5], 256, 256, 16
    $region33: #{tpu_custom_call.1} parent=1 // pred_fallthru
      _
    // Predicated region
    $region34: #{tpu_custom_call.1} parent=1 // pred_check
      _
    $region35: #{tpu_custom_call.1} parent=1 // pred_check_branch
      %223 = sbr.rel (0) target = $region37
    $region36: #{tpu_custom_call.1} parent=1 // pred_region
      %224 = dma.done [#allocation5], 1024
    $region37: #{tpu_custom_call.1} parent=1 // pred_fallthru
      _
    %225 = vsyncpa [#allocation4], 1
    %226 = vsyncpa [#allocation7], 1
    %227 = vsyncpa [#allocation5], 1

</llo_original>
